<compile_context>
chip_gen: v7x
topology: tpu7x:2x2x1
jax: 0.10.0
libtpu: 0.0.40
codegen_flags: <defaults>
</compile_context>

<pallas_src>
import functools

import jax
import jax.numpy as jnp
from jax.experimental import pallas as pl
from jax.experimental.pallas import tpu as pltpu

EPS = 1e-5


# ----------------------------------------------------------------------------
# Tiling helpers
# ----------------------------------------------------------------------------
def _default_tile():
    """256 on v6e/v7x (256x256 MXU); 128 on v5e (4x 128x128 MXU)."""
    try:
        kind = jax.devices()[0].device_kind.lower()
        if "v5 lite" in kind or "v5e" in kind or "v5litepod" in kind:
            return 128
    except Exception:
        pass
    return 256


def _pick_tile(dim, pref, base):
    """Largest divisor of dim that is a multiple of `base` and <= pref,
    falling back to the full extent (always legal)."""
    if dim <= pref:
        return dim
    t = (pref // base) * base
    while t >= base:
        if dim % t == 0:
            return t
        t -= base
    return dim


def _pick_tk(K, cap=512):
    """Largest multiple of 128 <= cap that divides K, else full K."""
    if K <= cap:
        return K
    t = cap
    while t >= 128:
        if K % t == 0:
            return t
        t -= 128
    return K


# ----------------------------------------------------------------------------
# Pallas kernels
# ----------------------------------------------------------------------------
def _mm_kernel(*refs, relu, has_res):
    """Fused (X @ W) * scale + shift [+ residual] [+ ReLU].

    K-reduction over grid axis 2; fp32 accumulator in VMEM scratch."""
    if has_res:
        x_ref, w_ref, s_ref, b_ref, r_ref, o_ref, acc_ref = refs
    else:
        x_ref, w_ref, s_ref, b_ref, o_ref, acc_ref = refs

    @pl.when(pl.program_id(2) == 0)
    def _():
        acc_ref[...] = jnp.zeros_like(acc_ref)

    acc_ref[...] += jnp.dot(x_ref[...], w_ref[...],
                            preferred_element_type=jnp.float32)

    @pl.when(pl.program_id(2) == pl.num_programs(2) - 1)
    def _():
        y = acc_ref[...] * s_ref[...] + b_ref[...]
        if has_res:
            y = y + r_ref[...].astype(jnp.float32)
        if relu:
            y = jnp.maximum(y, 0.0)
        o_ref[...] = y.astype(o_ref.dtype)


@functools.partial(jax.jit, static_argnames=("relu", "out_dtype"))
def matmul_scale_bias(x, w, scale, shift, relu=False, residual=None,
                      out_dtype=jnp.bfloat16):
    """y[m,n] = act( sum_k x[m,k] w[k,n] * scale[n] + shift[n] (+ res[m,n]) )."""
    x = x.astype(jnp.bfloat16)
    w = w.astype(jnp.bfloat16)
    M, K = x.shape
    _, N = w.shape

    # Pad ragged K (only the 7x7 stem, K = 147) to a lane-aligned multiple of 128.
    if K % 8 != 0:
        Kp = ((K + 127) // 128) * 128
        x = jnp.pad(x, ((0, 0), (0, Kp - K)))
        w = jnp.pad(w, ((0, Kp - K), (0, 0)))
        K = Kp

    pref = _default_tile()
    tm = _pick_tile(M, pref, 8)
    tn = _pick_tile(N, pref, 128)
    tk = _pick_tk(K)
    grid = (M // tm, N // tn, K // tk)

    scale2 = scale.reshape(1, N).astype(jnp.float32)
    shift2 = shift.reshape(1, N).astype(jnp.float32)

    in_specs = [
        pl.BlockSpec((tm, tk), lambda i, j, k: (i, k)),
        pl.BlockSpec((tk, tn), lambda i, j, k: (k, j)),
        pl.BlockSpec((1, tn), lambda i, j, k: (0, j)),
        pl.BlockSpec((1, tn), lambda i, j, k: (0, j)),
    ]
    args = [x, w, scale2, shift2]
    has_res = residual is not None
    if has_res:
        # Residual tile index ignores k -> fetched once per (i, j).
        in_specs.append(pl.BlockSpec((tm, tn), lambda i, j, k: (i, j)))
        args.append(residual.astype(jnp.bfloat16))

    kernel = functools.partial(_mm_kernel, relu=relu, has_res=has_res)
    return pl.pallas_call(
        kernel,
        out_shape=jax.ShapeDtypeStruct((M, N), out_dtype),
        grid_spec=pltpu.PrefetchScalarGridSpec(
            num_scalar_prefetch=0,
            grid=grid,
            in_specs=in_specs,
            out_specs=pl.BlockSpec((tm, tn), lambda i, j, k: (i, j)),
            scratch_shapes=[pltpu.VMEM((tm, tn), jnp.float32)],
        ),
        compiler_params=pltpu.CompilerParams(
            dimension_semantics=("parallel", "parallel", "arbitrary"),
            vmem_limit_bytes=32 * 1024 * 1024),
    )(*args)


def _window_max_kernel(x_ref, o_ref):
    o_ref[...] = jnp.max(x_ref[...], axis=1)


@jax.jit
def window_max(patches):  # (M, kk, C) -> (M, C), tiled over M
    M, KK, C = patches.shape
    tm = _pick_tile(M, 1024, 8)
    grid = (M // tm,)
    return pl.pallas_call(
        _window_max_kernel,
        out_shape=jax.ShapeDtypeStruct((M, C), patches.dtype),
        grid_spec=pltpu.PrefetchScalarGridSpec(
            num_scalar_prefetch=0,
            grid=grid,
            in_specs=[pl.BlockSpec((tm, KK, C), lambda i: (i, 0, 0))],
            out_specs=pl.BlockSpec((tm, C), lambda i: (i, 0)),
        ),
        compiler_params=pltpu.CompilerParams(
            dimension_semantics=("parallel",)),
    )(patches)


def _global_mean_kernel(x_ref, o_ref):
    o_ref[...] = jnp.mean(x_ref[...].astype(jnp.float32), axis=1,
                          keepdims=True).astype(o_ref.dtype)


@jax.jit
def global_avg_pool(x):  # (N, H*W, C) -> (N, C), tiled over batch
    N, HW, C = x.shape
    out = pl.pallas_call(
        _global_mean_kernel,
        out_shape=jax.ShapeDtypeStruct((N, 1, C), x.dtype),
        grid_spec=pltpu.PrefetchScalarGridSpec(
            num_scalar_prefetch=0,
            grid=(N,),
            in_specs=[pl.BlockSpec((1, HW, C), lambda n: (n, 0, 0))],
            out_specs=pl.BlockSpec((1, 1, C), lambda n: (n, 0, 0)),
        ),
        compiler_params=pltpu.CompilerParams(
            dimension_semantics=("parallel",)),
    )(x)
    return out.reshape(N, C)


# ----------------------------------------------------------------------------
# Plain-JAX glue: im2col patch extraction (bf16)
# ----------------------------------------------------------------------------
def _im2col(x, kh, kw, stride, pad, pad_value=0.0):
    N, H, W, C = x.shape
    xp = jnp.pad(x, ((0, 0), (pad, pad), (pad, pad), (0, 0)),
                 constant_values=pad_value)
    Ho = (H + 2 * pad - kh) // stride + 1
    Wo = (W + 2 * pad - kw) // stride + 1
    cols = []
    for i in range(kh):
        for j in range(kw):
            sl = jax.lax.slice(
                xp,
                (0, i, j, 0),
                (N, i + (Ho - 1) * stride + 1, j + (Wo - 1) * stride + 1, C),
                (1, stride, stride, 1))
            cols.append(sl)
    patches = jnp.stack(cols, axis=3)  # (N, Ho, Wo, kh*kw, C)
    return patches, Ho, Wo


def conv_bn(x, p, stride, pad, relu, residual=None):
    """Conv (kh,kw,stride,pad) + folded eval BatchNorm + optional residual/ReLU."""
    w = p["w"]
    kh, kw, cin, cout = w.shape
    N = x.shape[0]
    if kh == 1 and kw == 1 and pad == 0:
        if stride > 1:
            x = x[:, ::stride, ::stride, :]
        Ho, Wo = x.shape[1], x.shape[2]
        patches = x.reshape(N * Ho * Wo, cin)
    else:
        patches, Ho, Wo = _im2col(x, kh, kw, stride, pad)
        patches = patches.reshape(N * Ho * Wo, kh * kw * cin)
    wm = w.reshape(kh * kw * cin, cout)
    res2d = None if residual is None else residual.reshape(N * Ho * Wo, cout)
    y = matmul_scale_bias(patches, wm, p["scale"], p["shift"], relu=relu,
                          residual=res2d)
    return y.reshape(N, Ho, Wo, cout)


# ----------------------------------------------------------------------------
# Deterministic parameter construction (shapes from torchvision resnet50)
# ----------------------------------------------------------------------------
def make_conv_bn(key, kh, kw, cin, cout):
    k1, k2, k3, k4, k5 = jax.random.split(key, 5)
    fan_in = kh * kw * cin
    w = jax.random.normal(k1, (kh, kw, cin, cout), jnp.float32) * (2.0 / fan_in) ** 0.5
    gamma = 1.0 + 0.1 * jax.random.normal(k2, (cout,), jnp.float32)
    beta = 0.1 * jax.random.normal(k3, (cout,), jnp.float32)
    r_mean = 0.1 * jax.random.normal(k4, (cout,), jnp.float32)
    r_var = 1.0 + 0.1 * jnp.abs(jax.random.normal(k5, (cout,), jnp.float32))
    scale = gamma / jnp.sqrt(r_var + EPS)
    shift = beta - r_mean * scale
    return {"w": w.astype(jnp.bfloat16), "scale": scale, "shift": shift}


def make_bottleneck(key, cin, mid, stride):
    ks = jax.random.split(key, 4)
    p = {
        "conv1": make_conv_bn(ks[0], 1, 1, cin, mid),
        "conv2": make_conv_bn(ks[1], 3, 3, mid, mid),
        "conv3": make_conv_bn(ks[2], 1, 1, mid, mid * 4),
        "down": None,
        "stride": stride,
    }
    if stride != 1 or cin != mid * 4:
        p["down"] = make_conv_bn(ks[3], 1, 1, cin, mid * 4)
    return p


def make_resnet50_params(key, n_classes=200):
    keys = jax.random.split(key, 6)
    params = {"stem": make_conv_bn(keys[0], 7, 7, 3, 64)}
    cfg = [(64, 3, 1), (128, 4, 2), (256, 6, 2), (512, 3, 2)]  # ResNet-50 bottleneck
    cin = 64
    layers = []
    for li, (mid, nblocks, stride) in enumerate(cfg):
        bkeys = jax.random.split(keys[1 + li], nblocks)
        blocks = []
        for bi in range(nblocks):
            s = stride if bi == 0 else 1
            blocks.append(make_bottleneck(bkeys[bi], cin, mid, s))
            cin = mid * 4
        layers.append(blocks)
    params["layers"] = layers
    # fc: kaiming-normal weight, zero bias (matches nn.init in the module).
    # Pad the output dim to a lane-dense multiple of 128 (200 -> 256).
    n_pad = ((n_classes + 127) // 128) * 128
    fc_w = jax.random.normal(keys[5], (2048, n_classes), jnp.float32) * (2.0 / 2048) ** 0.5
    params["fc_w"] = jnp.pad(fc_w, ((0, 0), (0, n_pad - n_classes))).astype(jnp.bfloat16)
    params["fc_b"] = jnp.zeros((n_pad,), jnp.float32)
    params["n_classes"] = n_classes
    return params


# ----------------------------------------------------------------------------
# Forward pass
# ----------------------------------------------------------------------------
def bottleneck_forward(x, p):
    stride = p["stride"]
    out = conv_bn(x, p["conv1"], stride=1, pad=0, relu=True)
    out = conv_bn(out, p["conv2"], stride=stride, pad=1, relu=True)
    if p["down"] is not None:
        identity = conv_bn(x, p["down"], stride=stride, pad=0, relu=False)
    else:
        identity = x
    # conv3 with the residual add + ReLU fused into the matmul epilogue.
    out = conv_bn(out, p["conv3"], stride=1, pad=0, relu=True, residual=identity)
    return out


def resnet50_forward(params, x_nchw):
    # layout: NCHW (PyTorch) in -> NHWC bf16 internally -> (N, n_classes) fp32 logits
    x = jnp.transpose(x_nchw, (0, 2, 3, 1)).astype(jnp.bfloat16)

    # stem: conv7x7 s2 p3 + BN + ReLU
    x = conv_bn(x, params["stem"], stride=2, pad=3, relu=True)

    # maxpool 3x3 stride 2 pad 1
    patches, Ho, Wo = _im2col(x, 3, 3, 2, 1, pad_value=-jnp.inf)
    N, C = x.shape[0], x.shape[3]
    x = window_max(patches.reshape(N * Ho * Wo, 9, C)).reshape(N, Ho, Wo, C)

    # layer1..layer4
    for blocks in params["layers"]:
        for bp in blocks:
            x = bottleneck_forward(x, bp)

    # adaptive avg pool (1,1) + flatten
    N, H, W, C = x.shape
    feats = global_avg_pool(x.reshape(N, H * W, C))  # (N, 2048)

    # fc (lane-dense padded output, sliced back to n_classes)
    n_pad = params["fc_w"].shape[1]
    ones = jnp.ones((n_pad,), jnp.float32)
    logits = matmul_scale_bias(feats, params["fc_w"], ones, params["fc_b"],
                               relu=False, out_dtype=jnp.float32)
    return logits[:, :params["n_classes"]]


if __name__ == "__main__":
    key = jax.random.PRNGKey(0)
    k_params, k_input = jax.random.split(key)

    n_classes = 200
    params = make_resnet50_params(k_params, n_classes=n_classes)

    # Small input consistent with the module: NCHW, 3 input channels.
    x = jax.random.normal(k_input, (2, 3, 64, 64), jnp.float32)

    logits = resnet50_forward(params, x)
    logits = jax.block_until_ready(logits)

    assert logits.shape == (2, n_classes)
    assert bool(jnp.all(jnp.isfinite(logits)))
    print("KERNEL_OK")
</pallas_src>

<mosaic_0001>
module attributes {stable_mosaic.version = 11 : i64} {
  func.func @_mm_kernel(%arg0: i32, %arg1: i32, %arg2: i32, %arg3: memref<256x256xbf16, #tpu.memory_space<vmem>>, %arg4: memref<256x64xbf16, #tpu.memory_space<vmem>>, %arg5: memref<1x64xf32, #tpu.memory_space<vmem>>, %arg6: memref<1x64xf32, #tpu.memory_space<vmem>>, %arg7: memref<256x64xbf16, #tpu.memory_space<vmem>>, %arg8: memref<256x64xf32, #tpu.memory_space<vmem>>) attributes {dimension_semantics = [#tpu.dimension_semantics<parallel>, #tpu.dimension_semantics<parallel>, #tpu.dimension_semantics<arbitrary>], iteration_bounds = array<i64: 8, 1, 1>, scalar_prefetch = 0 : i64, scratch_operands = 1 : i64, tpu.core_type = #tpu.core_type<tc>, window_params = [{transform_indices = @transform_0, window_bounds = array<i64: 256, 256>}, {transform_indices = @transform_1, window_bounds = array<i64: 256, 64>}, {transform_indices = @transform_2, window_bounds = array<i64: 1, 64>}, {transform_indices = @transform_3, window_bounds = array<i64: 1, 64>}, {transform_indices = @transform_4, window_bounds = array<i64: 256, 64>}]} {
    %c0_i32 = arith.constant 0 : i32
    %0 = arith.cmpi eq, %arg2, %c0_i32 : i32
    %1 = arith.extui %0 : i1 to i32
    %c0_i32_0 = arith.constant 0 : i32
    %2 = arith.cmpi ne, %1, %c0_i32_0 : i32
    scf.if %2 {
      %cst_10 = arith.constant 0.000000e+00 : f32
      %12 = vector.broadcast %cst_10 : f32 to vector<256x64xf32>
      %c0_11 = arith.constant 0 : index
      %c0_12 = arith.constant 0 : index
      %13 = vector.load %arg8[%c0_11, %c0_12] : memref<256x64xf32, #tpu.memory_space<vmem>>, vector<256x64xf32>
      tpu.vector_store %arg8[%c0_11, %c0_12], %12 {strides = array<i32>} : memref<256x64xf32, #tpu.memory_space<vmem>>, vector<256x64xf32>,
    } else {
    }
    %c0 = arith.constant 0 : index
    %c0_1 = arith.constant 0 : index
    %3 = vector.load %arg8[%c0, %c0_1] : memref<256x64xf32, #tpu.memory_space<vmem>>, vector<256x64xf32>
    %c0_2 = arith.constant 0 : index
    %c0_3 = arith.constant 0 : index
    %4 = vector.load %arg3[%c0_2, %c0_3] : memref<256x256xbf16, #tpu.memory_space<vmem>>, vector<256x256xbf16>
    %c0_4 = arith.constant 0 : index
    %c0_5 = arith.constant 0 : index
    %5 = vector.load %arg4[%c0_4, %c0_5] : memref<256x64xbf16, #tpu.memory_space<vmem>>, vector<256x64xbf16>
    %cst = arith.constant dense<0.000000e+00> : vector<256x64xf32>
    %6 = tpu.matmul %4, %5, %cst {dimension_numbers = #tpu.dot_dimension_numbers<[1], [0], [0], [1], [0, 0, 1, 1], [], []>} : vector<256x256xbf16>, vector<256x64xbf16>, vector<256x64xf32> -> vector<256x64xf32>
    %7 = arith.addf %3, %6 : vector<256x64xf32>
    %c0_6 = arith.constant 0 : index
    %c0_7 = arith.constant 0 : index
    %8 = vector.load %arg8[%c0_6, %c0_7] : memref<256x64xf32, #tpu.memory_space<vmem>>, vector<256x64xf32>
    tpu.vector_store %arg8[%c0_6, %c0_7], %7 {strides = array<i32>} : memref<256x64xf32, #tpu.memory_space<vmem>>, vector<256x64xf32>,
    %c0_i32_8 = arith.constant 0 : i32
    %9 = arith.cmpi eq, %arg2, %c0_i32_8 : i32
    %10 = arith.extui %9 : i1 to i32
    %c0_i32_9 = arith.constant 0 : i32
    %11 = arith.cmpi ne, %10, %c0_i32_9 : i32
    scf.if %11 {
      %c0_10 = arith.constant 0 : index
      %c0_11 = arith.constant 0 : index
      %12 = vector.load %arg8[%c0_10, %c0_11] : memref<256x64xf32, #tpu.memory_space<vmem>>, vector<256x64xf32>
      %c0_12 = arith.constant 0 : index
      %c0_13 = arith.constant 0 : index
      %13 = vector.load %arg5[%c0_12, %c0_13] : memref<1x64xf32, #tpu.memory_space<vmem>>, vector<1x64xf32>
      %14 = vector.broadcast %13 : vector<1x64xf32> to vector<256x64xf32>
      %15 = arith.mulf %12, %14 : vector<256x64xf32>
      %c0_14 = arith.constant 0 : index
      %c0_15 = arith.constant 0 : index
      %16 = vector.load %arg6[%c0_14, %c0_15] : memref<1x64xf32, #tpu.memory_space<vmem>>, vector<1x64xf32>
      %17 = vector.broadcast %16 : vector<1x64xf32> to vector<256x64xf32>
      %18 = arith.addf %15, %17 : vector<256x64xf32>
      %cst_16 = arith.constant 0.000000e+00 : f32
      %19 = vector.broadcast %cst_16 : f32 to vector<256x64xf32>
      %20 = arith.maximumf %18, %19 : vector<256x64xf32>
      %21 = arith.truncf %20 : vector<256x64xf32> to vector<256x64xbf16>
      %c0_17 = arith.constant 0 : index
      %c0_18 = arith.constant 0 : index
      %22 = vector.load %arg7[%c0_17, %c0_18] : memref<256x64xbf16, #tpu.memory_space<vmem>>, vector<256x64xbf16>
      tpu.vector_store %arg7[%c0_17, %c0_18], %21 {strides = array<i32>} : memref<256x64xbf16, #tpu.memory_space<vmem>>, vector<256x64xbf16>,
    } else {
    }
    return
  }
  func.func @transform_0(%arg0: i32, %arg1: i32, %arg2: i32) -> (i32, i32) {
    %c0_i32 = arith.constant 0 : i32
    return %arg0, %arg2 : i32, i32
  }
  func.func @transform_1(%arg0: i32, %arg1: i32, %arg2: i32) -> (i32, i32) {
    %c0_i32 = arith.constant 0 : i32
    return %arg2, %arg1 : i32, i32
  }
  func.func @transform_2(%arg0: i32, %arg1: i32, %arg2: i32) -> (i32, i32) {
    %c0_i32 = arith.constant 0 : i32
    %c0_i32_0 = arith.constant 0 : i32
    return %c0_i32, %arg1 : i32, i32
  }
  func.func @transform_3(%arg0: i32, %arg1: i32, %arg2: i32) -> (i32, i32) {
    %c0_i32 = arith.constant 0 : i32
    %c0_i32_0 = arith.constant 0 : i32
    return %c0_i32, %arg1 : i32, i32
  }
  func.func @transform_4(%arg0: i32, %arg1: i32, %arg2: i32) -> (i32, i32) {
    %c0_i32 = arith.constant 0 : i32
    return %arg0, %arg1 : i32, i32
  }
}

</mosaic_0001>

<llo_original>
// kernel: matmul_scale_bias.1
$region0: #{matmul_scale_bias.1}
  #allocation0 [shape = 'u32[]', space=smem, size = 0x4, offset = 0x4, fixed_abs, tag = 'smem constant byte address 0x4 - core index']
  #allocation1 [shape = 'u32[144,128]{1,0:T(1,128)}', space=vmem, size = 0x12000, scoped, tag = 'internal scratch']
  #allocation2 [shape = 'f32[256,64]{1,0:T(8,128)}', space=vmem, size = 0x20000, scoped, tag = 'scratch operand']
  %s0 = inlined_call_operand.vmem [shape: bf16[2048,256], index: 0, kind: input, shape index: {}]
  %s1 = inlined_call_operand.vmem [shape: bf16[256,64], index: 1, kind: input, shape index: {}]
  %s2 = inlined_call_operand.vmem [shape: f32[1,64], index: 2, kind: input, shape index: {}]
  %s3 = inlined_call_operand.vmem [shape: f32[1,64], index: 3, kind: input, shape index: {}]
  %s4 = inlined_call_operand.vmem [shape: bf16[2048,64], index: 4, kind: output, shape index: {}]
  %s5 = sld [smem:[#allocation0]]
  $region57: #{matmul_scale_bias.1} parent=0
    _
  %s7 = ssub.s32 1, %s5
  %s8 = scalar_select 0, %s7, %s5
  loop: start=0, step=1, limit=10
  $region2: #{matmul_scale_bias.1} parent=0 // loop_pre_header
    _
  $region3: #{matmul_scale_bias.1} parent=0 // loop_header
    %s10 = sphi 0, %s14
    %p11 = scmp.ge.s32.totalorder %s10, 10
    %s17 = sphi 0, %s36
    %s18 = sphi 0, %s32
    %s19 = sphi 0, %s28
    %s20 = sphi 0, %s17
    %s21 = sphi 0, %s18
    %s22 = sphi 0, %s19
    %s23 = sphi 0, %s20
    %s24 = sphi 0, %s21
    %s25 = sphi 0, %s22
    %s41 = sphi 0, %s43
    %s44 = sphi 0, %s41
    %s45 = sphi 0, %s44
    %s61 = sphi 0, %s45
    %s69 = sphi 0, %s71
    %s72 = sphi 0, %s69
    %s73 = sphi 0, %s72
    %s89 = sphi 0, %s73
    %s95 = sphi 0, %s97
    %s98 = sphi 0, %s95
    %s99 = sphi 0, %s98
    %s115 = sphi 0, %s99
    %s121 = sphi 0, %s123
    %s124 = sphi 0, %s121
    %s125 = sphi 0, %s124
    %s141 = sphi 0, %s125
    %s149 = sphi 0, %s151
    %s152 = sphi 0, %s149
    %s153 = sphi 0, %s152
    %s169 = sphi 0, %s153
  $region4: #{matmul_scale_bias.1} parent=0 // loop_header_branch
    %13 = sbr.rel (%p11) target = $region8
  $region5: #{matmul_scale_bias.1} parent=0 // loop_body
    %s15 = ssub.s32 %s10, 1
    %s16 = ssub.s32 %s10, 2
    %s26 = sadd.s32 1, %s19
    %p27 = scmp.ge.s32.totalorder %s26, 1
    %s28 = scalar_select %p27, 0, %s26
    %s29 = sadd.s32 1, %s18
    %s30 = scalar_select %p27, %s29, %s18
    %p31 = scmp.ge.s32.totalorder %s30, 1
    %s32 = scalar_select %p31, 0, %s30
    %s33 = sadd.s32 1, %s17
    %s34 = scalar_select %p31, %s33, %s17
    %p35 = scmp.ge.s32.totalorder %s34, 8
    %s36 = scalar_select %p35, 0, %s34
    %s37 = ssub.s32 %s17, %s36
    %s38 = ssub.s32 %s19, %s28
    %s39 = sor.u32 %s37, %s38
    %p40 = scmp.eq.s32.totalorder %s39, 0
    %s42 = sadd.s32 %s41, 1
    %s43 = scalar_select %p40, %s41, %s42
    %p46 = pneg %p40
    %p47 = scmp.eq.s32.totalorder %s10, 7
    %p48 = por %p46, %p47
    %p49 = scmp.ne.s32.totalorder %s41, %s44
    %p50 = scmp.eq.s32.totalorder %s10, 0
    %p51 = por %p49, %p50
    %p52 = scmp.ne.s32.totalorder %s41, %s44
    %p53 = scmp.eq.s32.totalorder %s15, 7
    %p54 = por %p52, %p53
    %p55 = scmp.ne.s32.totalorder %s44, %s45
    %p56 = scmp.eq.s32.totalorder %s15, 0
    %p57 = por %p55, %p56
    %p58 = scmp.ne.s32.totalorder %s44, %s45
    %p59 = scmp.eq.s32.totalorder %s16, 7
    %p60 = por %p58, %p59
    %p62 = scmp.ne.s32.totalorder %s45, %s61
    %p63 = scmp.eq.s32.totalorder %s16, 0
    %p64 = por %p62, %p63
    %s65 = ssub.s32 %s19, %s28
    %s66 = ssub.s32 %s18, %s32
    %s67 = sor.u32 %s65, %s66
    %p68 = scmp.eq.s32.totalorder %s67, 0
    %s70 = sadd.s32 %s69, 1
    %s71 = scalar_select %p68, %s69, %s70
    %p74 = pneg %p68
    %p75 = scmp.eq.s32.totalorder %s10, 7
    %p76 = por %p74, %p75
    %p77 = scmp.ne.s32.totalorder %s69, %s72
    %p78 = scmp.eq.s32.totalorder %s10, 0
    %p79 = por %p77, %p78
    %p80 = scmp.ne.s32.totalorder %s69, %s72
    %p81 = scmp.eq.s32.totalorder %s15, 7
    %p82 = por %p80, %p81
    %p83 = scmp.ne.s32.totalorder %s72, %s73
    %p84 = scmp.eq.s32.totalorder %s15, 0
    %p85 = por %p83, %p84
    %p86 = scmp.ne.s32.totalorder %s72, %s73
    %p87 = scmp.eq.s32.totalorder %s16, 7
    %p88 = por %p86, %p87
    %p90 = scmp.ne.s32.totalorder %s73, %s89
    %p91 = scmp.eq.s32.totalorder %s16, 0
    %p92 = por %p90, %p91
    %s93 = ssub.s32 %s18, %s32
    %p94 = scmp.eq.s32.totalorder %s93, 0
    %s96 = sadd.s32 %s95, 1
    %s97 = scalar_select %p94, %s95, %s96
    %p100 = pneg %p94
    %p101 = scmp.eq.s32.totalorder %s10, 7
    %p102 = por %p100, %p101
    %p103 = scmp.ne.s32.totalorder %s95, %s98
    %p104 = scmp.eq.s32.totalorder %s10, 0
    %p105 = por %p103, %p104
    %p106 = scmp.ne.s32.totalorder %s95, %s98
    %p107 = scmp.eq.s32.totalorder %s15, 7
    %p108 = por %p106, %p107
    %p109 = scmp.ne.s32.totalorder %s98, %s99
    %p110 = scmp.eq.s32.totalorder %s15, 0
    %p111 = por %p109, %p110
    %p112 = scmp.ne.s32.totalorder %s98, %s99
    %p113 = scmp.eq.s32.totalorder %s16, 7
    %p114 = por %p112, %p113
    %p116 = scmp.ne.s32.totalorder %s99, %s115
    %p117 = scmp.eq.s32.totalorder %s16, 0
    %p118 = por %p116, %p117
    %s119 = ssub.s32 %s18, %s32
    %p120 = scmp.eq.s32.totalorder %s119, 0
    %s122 = sadd.s32 %s121, 1
    %s123 = scalar_select %p120, %s121, %s122
    %p126 = pneg %p120
    %p127 = scmp.eq.s32.totalorder %s10, 7
    %p128 = por %p126, %p127
    %p129 = scmp.ne.s32.totalorder %s121, %s124
    %p130 = scmp.eq.s32.totalorder %s10, 0
    %p131 = por %p129, %p130
    %p132 = scmp.ne.s32.totalorder %s121, %s124
    %p133 = scmp.eq.s32.totalorder %s15, 7
    %p134 = por %p132, %p133
    %p135 = scmp.ne.s32.totalorder %s124, %s125
    %p136 = scmp.eq.s32.totalorder %s15, 0
    %p137 = por %p135, %p136
    %p138 = scmp.ne.s32.totalorder %s124, %s125
    %p139 = scmp.eq.s32.totalorder %s16, 7
    %p140 = por %p138, %p139
    %p142 = scmp.ne.s32.totalorder %s125, %s141
    %p143 = scmp.eq.s32.totalorder %s16, 0
    %p144 = por %p142, %p143
    %s145 = ssub.s32 %s17, %s36
    %s146 = ssub.s32 %s18, %s32
    %s147 = sor.u32 %s145, %s146
    %p148 = scmp.eq.s32.totalorder %s147, 0
    %s150 = sadd.s32 %s149, 1
    %s151 = scalar_select %p148, %s149, %s150
    %p154 = pneg %p148
    %p155 = scmp.eq.s32.totalorder %s10, 7
    %p156 = por %p154, %p155
    %p157 = scmp.ne.s32.totalorder %s149, %s152
    %p158 = scmp.eq.s32.totalorder %s10, 0
    %p159 = por %p157, %p158
    %p160 = scmp.ne.s32.totalorder %s149, %s152
    %p161 = scmp.eq.s32.totalorder %s15, 7
    %p162 = por %p160, %p161
    %p163 = scmp.ne.s32.totalorder %s152, %s153
    %p164 = scmp.eq.s32.totalorder %s15, 0
    %p165 = por %p163, %p164
    %p166 = scmp.ne.s32.totalorder %s152, %s153
    %p167 = scmp.eq.s32.totalorder %s16, 7
    %p168 = por %p166, %p167
    %p170 = scmp.ne.s32.totalorder %s153, %s169
    %p171 = scmp.eq.s32.totalorder %s16, 0
    %p172 = por %p170, %p171
    %p173 = scmp.le.s32.totalorder 1, %s10
    %p174 = scmp.lt.s32.totalorder %s10, 9
    %p175 = pnand %p173, %p174
    %p176 = pneg %p175
    // Predicated region
    $region9: #{matmul_scale_bias.1} parent=5 // pred_check
      _
    $region10: #{matmul_scale_bias.1} parent=5 // pred_check_branch
      %178 = sbr.rel (%p175) target = $region12
    $region11: #{matmul_scale_bias.1} parent=5 // pred_region
      %s179 = ssub.s32 %s10, 1
      // Predicated region
      $region13: #{matmul_scale_bias.1} parent=11 // pred_check
        %p180 = pneg %p85
      $region14: #{matmul_scale_bias.1} parent=11 // pred_check_branch
        %182 = sbr.rel (%p180) target = $region16
      $region15: #{matmul_scale_bias.1} parent=11 // pred_region
        %s183 = smul.u32 32, %s22
        %p184 = scmp.lt.s32.totalorder %s183, 31
        %s185 = scalar_select %p184, %s183, 31
        %p186 = scmp.lt.s32.totalorder %s21, 0
        %s187 = scalar_select %p186, %s21, 0
        %s188 = sadd.s32 %s187, %s185
        %s189 = smul.addr %s188, 4
        %s190 = scalar_lea.vmem %s1, %s189
        %s191 = smul.u32 32, %s22
      $region16: #{matmul_scale_bias.1} parent=11 // pred_fallthru
        _
      // Predicated region
      $region17: #{matmul_scale_bias.1} parent=11 // pred_check
        %p192 = pneg %p111
      $region18: #{matmul_scale_bias.1} parent=11 // pred_check_branch
        %194 = sbr.rel (%p192) target = $region20
      $region19: #{matmul_scale_bias.1} parent=11 // pred_region
        %p195 = scmp.lt.s32.totalorder %s21, 0
        %s196 = scalar_select %p195, %s21, 0
        %s197 = scalar_lea.vmem %s2, %s196
      $region20: #{matmul_scale_bias.1} parent=11 // pred_fallthru
        _
      // Predicated region
      $region21: #{matmul_scale_bias.1} parent=11 // pred_check
        %p198 = pneg %p137
      $region22: #{matmul_scale_bias.1} parent=11 // pred_check_branch
        %200 = sbr.rel (%p198) target = $region24
      $region23: #{matmul_scale_bias.1} parent=11 // pred_region
        %p201 = scmp.lt.s32.totalorder %s21, 0
        %s202 = scalar_select %p201, %s21, 0
        %s203 = scalar_lea.vmem %s3, %s202
      $region24: #{matmul_scale_bias.1} parent=11 // pred_fallthru
        _
    $region12: #{matmul_scale_bias.1} parent=5 // pred_fallthru
      _
    %p204 = scmp.lt.s32.totalorder %s10, 8
    // Predicated region
    $region25: #{matmul_scale_bias.1} parent=5 // pred_check
      %p205 = pneg %p204
    $region26: #{matmul_scale_bias.1} parent=5 // pred_check_branch
      %207 = sbr.rel (%p205) target = $region28
    $region27: #{matmul_scale_bias.1} parent=5 // pred_region
      // Predicated region
      $region29: #{matmul_scale_bias.1} parent=27 // pred_check
        %p208 = pneg %p51
      $region30: #{matmul_scale_bias.1} parent=27 // pred_check_branch
        %210 = sbr.rel (%p208) target = $region32
      $region31: #{matmul_scale_bias.1} parent=27 // pred_region
        %s211 = smul.u32 32, %s17
        %s212 = smul.u32 2, %s19
        %p213 = scmp.lt.s32.totalorder %s211, 255
        %s214 = scalar_select %p213, %s211, 255
        %p215 = scmp.lt.s32.totalorder %s212, 1
        %s216 = scalar_select %p215, %s212, 1
        %s217 = smul.addr %s214, 2
        %s218 = sadd.s32 %s216, %s217
        %s219 = smul.addr %s218, 4
        %s220 = scalar_lea.vmem %s0, %s219
        %s221 = smul.u32 32, %s17
        %s222 = smul.u32 2, %s19
      $region32: #{matmul_scale_bias.1} parent=27 // pred_fallthru
        _
    $region28: #{matmul_scale_bias.1} parent=5 // pred_fallthru
      _
    %p223 = scmp.le.s32.totalorder 1, %s10
    %p224 = scmp.lt.s32.totalorder %s10, 9
    %p225 = pnand %p223, %p224
    %p226 = pneg %p225
    // Predicated region
    $region33: #{matmul_scale_bias.1} parent=5 // pred_check
      _
    $region34: #{matmul_scale_bias.1} parent=5 // pred_check_branch
      %228 = sbr.rel (%p225) target = $region36
    $region35: #{matmul_scale_bias.1} parent=5 // pred_region
      %s229 = ssub.s32 %s10, 1
      %s230 = smul.u32 32, %s20
      %s231 = smul.u32 2, %s22
      %p232 = scmp.lt.s32.totalorder %s230, 255
      %s233 = scalar_select %p232, %s230, 255
      %p234 = scmp.lt.s32.totalorder %s231, 1
      %s235 = scalar_select %p234, %s231, 1
      %s236 = smul.addr %s233, 2
      %s237 = sadd.s32 %s235, %s236
      %s238 = smul.addr %s237, 4
      %s239 = scalar_lea.vmem %s0, %s238
      %p240 = pneg %p57
      %p241 = pneg %p54
      %s242 = smul.u32 32, %s22
      %p243 = scmp.lt.s32.totalorder %s242, 31
      %s244 = scalar_select %p243, %s242, 31
      %p245 = scmp.lt.s32.totalorder %s21, 0
      %s246 = scalar_select %p245, %s21, 0
      %s247 = sadd.s32 %s246, %s244
      %s248 = smul.addr %s247, 4
      %s249 = scalar_lea.vmem %s1, %s248
      %p250 = pneg %p85
      %p251 = pneg %p82
      %p252 = scmp.lt.s32.totalorder %s21, 0
      %s253 = scalar_select %p252, %s21, 0
      %s254 = scalar_lea.vmem %s2, %s253
      %p255 = pneg %p111
      %p256 = pneg %p108
      %p257 = scmp.lt.s32.totalorder %s21, 0
      %s258 = scalar_select %p257, %s21, 0
      %s259 = scalar_lea.vmem %s3, %s258
      %p260 = pneg %p137
      %p261 = pneg %p134
      %p262 = pneg %p165
      %p263 = pneg %p162
      %s264 = smul.u32 32, %s20
      %p265 = scmp.lt.s32.totalorder %s264, 255
      %s266 = scalar_select %p265, %s264, 255
      %p267 = scmp.lt.s32.totalorder %s21, 0
      %s268 = scalar_select %p267, %s21, 0
      %s269 = sadd.s32 %s268, %s266
      %s270 = smul.addr %s269, 4
      %s271 = scalar_lea.vmem %s4, %s270
      %s272 = smul.u32 32, %s20
      %s273 = smul.u32 2, %s22
      %p274 = scmp.lt.s32.totalorder %s272, 255
      %s275 = scalar_select %p274, %s272, 255
      %p276 = scmp.lt.s32.totalorder %s273, 1
      %s277 = scalar_select %p276, %s273, 1
      %s278 = smul.addr %s275, 2
      %s279 = sadd.s32 %s277, %s278
      %s280 = smul.addr %s279, 4
      %s281 = scalar_lea.vmem %s0, %s280
      %s282 = smul.u32 32, %s20
      %s283 = smul.u32 2, %s22
      %s284 = smul.u32 32, %s22
      %p285 = scmp.lt.s32.totalorder %s284, 31
      %s286 = scalar_select %p285, %s284, 31
      %p287 = scmp.lt.s32.totalorder %s21, 0
      %s288 = scalar_select %p287, %s21, 0
      %s289 = sadd.s32 %s288, %s286
      %s290 = smul.addr %s289, 4
      %s291 = scalar_lea.vmem %s1, %s290
      %s292 = smul.u32 32, %s22
      %p293 = scmp.lt.s32.totalorder %s21, 0
      %s294 = scalar_select %p293, %s21, 0
      %s295 = scalar_lea.vmem %s2, %s294
      %p296 = scmp.lt.s32.totalorder %s21, 0
      %s297 = scalar_select %p296, %s21, 0
      %s298 = scalar_lea.vmem %s3, %s297
      %s299 = smul.u32 32, %s20
      %p300 = scmp.lt.s32.totalorder %s299, 255
      %s301 = scalar_select %p300, %s299, 255
      %p302 = scmp.lt.s32.totalorder %s21, 0
      %s303 = scalar_select %p302, %s21, 0
      %s304 = sadd.s32 %s303, %s301
      %s305 = smul.addr %s304, 4
      %s306 = scalar_lea.vmem %s4, %s305
      %s307 = smul.u32 32, %s20
      %p309 = scmp.eq.s32.totalorder %s22, 0
      // Predicated region
      $region37: #{matmul_scale_bias.1} parent=35 // pred_check
        %p310 = pneg %p309
      $region38: #{matmul_scale_bias.1} parent=35 // pred_check_branch
        %312 = sbr.rel (%p310) target = $region40
      $region39: #{matmul_scale_bias.1} parent=35 // pred_region
        %vm313 = vcmask 523264
        %314 = vst.msk [vmem:[#allocation2] sm:$0xff] %vm313, 0.0
        %315 = vst.msk [vmem:[#allocation2 + $0x8] sm:$0xff] %vm313, 0.0
        %316 = vst.msk [vmem:[#allocation2 + $0x10] sm:$0xff] %vm313, 0.0
        %317 = vst.msk [vmem:[#allocation2 + $0x18] sm:$0xff] %vm313, 0.0
        %318 = vst.msk [vmem:[#allocation2 + $0x20] sm:$0xff] %vm313, 0.0
        %319 = vst.msk [vmem:[#allocation2 + $0x28] sm:$0xff] %vm313, 0.0
        %320 = vst.msk [vmem:[#allocation2 + $0x30] sm:$0xff] %vm313, 0.0
        %321 = vst.msk [vmem:[#allocation2 + $0x38] sm:$0xff] %vm313, 0.0
        %322 = vst.msk [vmem:[#allocation2 + $0x40] sm:$0xff] %vm313, 0.0
        %323 = vst.msk [vmem:[#allocation2 + $0x48] sm:$0xff] %vm313, 0.0
        %324 = vst.msk [vmem:[#allocation2 + $0x50] sm:$0xff] %vm313, 0.0
        %325 = vst.msk [vmem:[#allocation2 + $0x58] sm:$0xff] %vm313, 0.0
        %326 = vst.msk [vmem:[#allocation2 + $0x60] sm:$0xff] %vm313, 0.0
        %327 = vst.msk [vmem:[#allocation2 + $0x68] sm:$0xff] %vm313, 0.0
        %328 = vst.msk [vmem:[#allocation2 + $0x70] sm:$0xff] %vm313, 0.0
        %329 = vst.msk [vmem:[#allocation2 + $0x78] sm:$0xff] %vm313, 0.0
        %330 = vst.msk [vmem:[#allocation2 + $0x80] sm:$0xff] %vm313, 0.0
        %331 = vst.msk [vmem:[#allocation2 + $0x88] sm:$0xff] %vm313, 0.0
        %332 = vst.msk [vmem:[#allocation2 + $0x90] sm:$0xff] %vm313, 0.0
        %333 = vst.msk [vmem:[#allocation2 + $0x98] sm:$0xff] %vm313, 0.0
        %334 = vst.msk [vmem:[#allocation2 + $0xa0] sm:$0xff] %vm313, 0.0
        %335 = vst.msk [vmem:[#allocation2 + $0xa8] sm:$0xff] %vm313, 0.0
        %336 = vst.msk [vmem:[#allocation2 + $0xb0] sm:$0xff] %vm313, 0.0
        %337 = vst.msk [vmem:[#allocation2 + $0xb8] sm:$0xff] %vm313, 0.0
        %338 = vst.msk [vmem:[#allocation2 + $0xc0] sm:$0xff] %vm313, 0.0
        %339 = vst.msk [vmem:[#allocation2 + $0xc8] sm:$0xff] %vm313, 0.0
        %340 = vst.msk [vmem:[#allocation2 + $0xd0] sm:$0xff] %vm313, 0.0
        %341 = vst.msk [vmem:[#allocation2 + $0xd8] sm:$0xff] %vm313, 0.0
        %342 = vst.msk [vmem:[#allocation2 + $0xe0] sm:$0xff] %vm313, 0.0
        %343 = vst.msk [vmem:[#allocation2 + $0xe8] sm:$0xff] %vm313, 0.0
        %344 = vst.msk [vmem:[#allocation2 + $0xf0] sm:$0xff] %vm313, 0.0
        %345 = vst.msk [vmem:[#allocation2 + $0xf8] sm:$0xff] %vm313, 0.0
      $region40: #{matmul_scale_bias.1} parent=35 // pred_fallthru
        _
      %v346 = vld [vmem:[#allocation2] sm:$0xff]
      %v347 = vld [vmem:[#allocation2 + $0x8] sm:$0xff]
      %v348 = vld [vmem:[#allocation2 + $0x10] sm:$0xff]
      %v349 = vld [vmem:[#allocation2 + $0x18] sm:$0xff]
      %v350 = vld [vmem:[#allocation2 + $0x20] sm:$0xff]
      %v351 = vld [vmem:[#allocation2 + $0x28] sm:$0xff]
      %v352 = vld [vmem:[#allocation2 + $0x30] sm:$0xff]
      %v353 = vld [vmem:[#allocation2 + $0x38] sm:$0xff]
      %v354 = vld [vmem:[#allocation2 + $0x40] sm:$0xff]
      %v355 = vld [vmem:[#allocation2 + $0x48] sm:$0xff]
      %v356 = vld [vmem:[#allocation2 + $0x50] sm:$0xff]
      %v357 = vld [vmem:[#allocation2 + $0x58] sm:$0xff]
      %v358 = vld [vmem:[#allocation2 + $0x60] sm:$0xff]
      %v359 = vld [vmem:[#allocation2 + $0x68] sm:$0xff]
      %v360 = vld [vmem:[#allocation2 + $0x70] sm:$0xff]
      %v361 = vld [vmem:[#allocation2 + $0x78] sm:$0xff]
      %v362 = vld [vmem:[#allocation2 + $0x80] sm:$0xff]
      %v363 = vld [vmem:[#allocation2 + $0x88] sm:$0xff]
      %v364 = vld [vmem:[#allocation2 + $0x90] sm:$0xff]
      %v365 = vld [vmem:[#allocation2 + $0x98] sm:$0xff]
      %v366 = vld [vmem:[#allocation2 + $0xa0] sm:$0xff]
      %v367 = vld [vmem:[#allocation2 + $0xa8] sm:$0xff]
      %v368 = vld [vmem:[#allocation2 + $0xb0] sm:$0xff]
      %v369 = vld [vmem:[#allocation2 + $0xb8] sm:$0xff]
      %v370 = vld [vmem:[#allocation2 + $0xc0] sm:$0xff]
      %v371 = vld [vmem:[#allocation2 + $0xc8] sm:$0xff]
      %v372 = vld [vmem:[#allocation2 + $0xd0] sm:$0xff]
      %v373 = vld [vmem:[#allocation2 + $0xd8] sm:$0xff]
      %v374 = vld [vmem:[#allocation2 + $0xe0] sm:$0xff]
      %v375 = vld [vmem:[#allocation2 + $0xe8] sm:$0xff]
      %v376 = vld [vmem:[#allocation2 + $0xf0] sm:$0xff]
      %v377 = vld [vmem:[#allocation2 + $0xf8] sm:$0xff]
      %v378 = vld [vmem:[%s281] sm:$0xff]
      %v379 = vld [vmem:[%s281 + $0x8] sm:$0xff]
      %v380 = vld [vmem:[%s281 + $0x10] sm:$0xff]
      %v381 = vld [vmem:[%s281 + $0x18] sm:$0xff]
      %v382 = vld [vmem:[%s281 + $0x20] sm:$0xff]
      %v383 = vld [vmem:[%s281 + $0x28] sm:$0xff]
      %v384 = vld [vmem:[%s281 + $0x30] sm:$0xff]
      %v385 = vld [vmem:[%s281 + $0x38] sm:$0xff]
      %v386 = vld [vmem:[%s281 + $0x40] sm:$0xff]
      %v387 = vld [vmem:[%s281 + $0x48] sm:$0xff]
      %v388 = vld [vmem:[%s281 + $0x50] sm:$0xff]
      %v389 = vld [vmem:[%s281 + $0x58] sm:$0xff]
      %v390 = vld [vmem:[%s281 + $0x60] sm:$0xff]
      %v391 = vld [vmem:[%s281 + $0x68] sm:$0xff]
      %v392 = vld [vmem:[%s281 + $0x70] sm:$0xff]
      %v393 = vld [vmem:[%s281 + $0x78] sm:$0xff]
      %v394 = vld [vmem:[%s281 + $0x80] sm:$0xff]
      %v395 = vld [vmem:[%s281 + $0x88] sm:$0xff]
      %v396 = vld [vmem:[%s281 + $0x90] sm:$0xff]
      %v397 = vld [vmem:[%s281 + $0x98] sm:$0xff]
      %v398 = vld [vmem:[%s281 + $0xa0] sm:$0xff]
      %v399 = vld [vmem:[%s281 + $0xa8] sm:$0xff]
      %v400 = vld [vmem:[%s281 + $0xb0] sm:$0xff]
      %v401 = vld [vmem:[%s281 + $0xb8] sm:$0xff]
      %v402 = vld [vmem:[%s281 + $0xc0] sm:$0xff]
      %v403 = vld [vmem:[%s281 + $0xc8] sm:$0xff]
      %v404 = vld [vmem:[%s281 + $0xd0] sm:$0xff]
      %v405 = vld [vmem:[%s281 + $0xd8] sm:$0xff]
      %v406 = vld [vmem:[%s281 + $0xe0] sm:$0xff]
      %v407 = vld [vmem:[%s281 + $0xe8] sm:$0xff]
      %v408 = vld [vmem:[%s281 + $0xf0] sm:$0xff]
      %v409 = vld [vmem:[%s281 + $0xf8] sm:$0xff]
      %v410 = vld [vmem:[%s291] sm:$0xf]
      %v411 = vld [vmem:[%s291 + $0x4] sm:$0xf]
      %v412 = vld [vmem:[%s291 + $0x8] sm:$0xf]
      %v413 = vld [vmem:[%s291 + $0xc] sm:$0xf]
      %v414 = vld [vmem:[%s291 + $0x10] sm:$0xf]
      %v415 = vld [vmem:[%s291 + $0x14] sm:$0xf]
      %v416 = vld [vmem:[%s291 + $0x18] sm:$0xf]
      %v417 = vld [vmem:[%s291 + $0x1c] sm:$0xf]
      %v418 = vld [vmem:[%s291 + $0x20] sm:$0xf]
      %v419 = vld [vmem:[%s291 + $0x24] sm:$0xf]
      %v420 = vld [vmem:[%s291 + $0x28] sm:$0xf]
      %v421 = vld [vmem:[%s291 + $0x2c] sm:$0xf]
      %v422 = vld [vmem:[%s291 + $0x30] sm:$0xf]
      %v423 = vld [vmem:[%s291 + $0x34] sm:$0xf]
      %v424 = vld [vmem:[%s291 + $0x38] sm:$0xf]
      %v425 = vld [vmem:[%s291 + $0x3c] sm:$0xf]
      %v426 = vld [vmem:[%s291 + $0x40] sm:$0xf]
      %v427 = vld [vmem:[%s291 + $0x44] sm:$0xf]
      %v428 = vld [vmem:[%s291 + $0x48] sm:$0xf]
      %v429 = vld [vmem:[%s291 + $0x4c] sm:$0xf]
      %v430 = vld [vmem:[%s291 + $0x50] sm:$0xf]
      %v431 = vld [vmem:[%s291 + $0x54] sm:$0xf]
      %v432 = vld [vmem:[%s291 + $0x58] sm:$0xf]
      %v433 = vld [vmem:[%s291 + $0x5c] sm:$0xf]
      %v434 = vld [vmem:[%s291 + $0x60] sm:$0xf]
      %v435 = vld [vmem:[%s291 + $0x64] sm:$0xf]
      %v436 = vld [vmem:[%s291 + $0x68] sm:$0xf]
      %v437 = vld [vmem:[%s291 + $0x6c] sm:$0xf]
      %v438 = vld [vmem:[%s291 + $0x70] sm:$0xf]
      %v439 = vld [vmem:[%s291 + $0x74] sm:$0xf]
      %v440 = vld [vmem:[%s291 + $0x78] sm:$0xf]
      %v441 = vld [vmem:[%s291 + $0x7c] sm:$0xf]
      %v474 = vunpack.c.l.b16 %v378
      %v475 = vunpack.c.h.b16 %v378
      %v476 = vunpack.c.l.b16 %v379
      %v477 = vunpack.c.h.b16 %v379
      %v478 = vunpack.c.l.b16 %v380
      %v479 = vunpack.c.h.b16 %v380
      %v480 = vunpack.c.l.b16 %v381
      %v481 = vunpack.c.h.b16 %v381
      %v482 = vunpack.c.l.b16 %v382
      %v483 = vunpack.c.h.b16 %v382
      %v484 = vunpack.c.l.b16 %v383
      %v485 = vunpack.c.h.b16 %v383
      %v486 = vunpack.c.l.b16 %v384
      %v487 = vunpack.c.h.b16 %v384
      %v488 = vunpack.c.l.b16 %v385
      %v489 = vunpack.c.h.b16 %v385
      %v490 = vunpack.c.l.b16 %v386
      %v491 = vunpack.c.h.b16 %v386
      %v492 = vunpack.c.l.b16 %v387
      %v493 = vunpack.c.h.b16 %v387
      %v494 = vunpack.c.l.b16 %v388
      %v495 = vunpack.c.h.b16 %v388
      %v496 = vunpack.c.l.b16 %v389
      %v497 = vunpack.c.h.b16 %v389
      %v498 = vunpack.c.l.b16 %v390
      %v499 = vunpack.c.h.b16 %v390
      %v500 = vunpack.c.l.b16 %v391
      %v501 = vunpack.c.h.b16 %v391
      %v502 = vunpack.c.l.b16 %v392
      %v503 = vunpack.c.h.b16 %v392
      %v504 = vunpack.c.l.b16 %v393
      %v505 = vunpack.c.h.b16 %v393
      %v506 = vunpack.c.l.b16 %v394
      %v507 = vunpack.c.h.b16 %v394
      %v508 = vunpack.c.l.b16 %v395
      %v509 = vunpack.c.h.b16 %v395
      %v510 = vunpack.c.l.b16 %v396
      %v511 = vunpack.c.h.b16 %v396
      %v512 = vunpack.c.l.b16 %v397
      %v513 = vunpack.c.h.b16 %v397
      %v514 = vunpack.c.l.b16 %v398
      %v515 = vunpack.c.h.b16 %v398
      %v516 = vunpack.c.l.b16 %v399
      %v517 = vunpack.c.h.b16 %v399
      %v518 = vunpack.c.l.b16 %v400
      %v519 = vunpack.c.h.b16 %v400
      %v520 = vunpack.c.l.b16 %v401
      %v521 = vunpack.c.h.b16 %v401
      %v522 = vunpack.c.l.b16 %v402
      %v523 = vunpack.c.h.b16 %v402
      %v524 = vunpack.c.l.b16 %v403
      %v525 = vunpack.c.h.b16 %v403
      %v526 = vunpack.c.l.b16 %v404
      %v527 = vunpack.c.h.b16 %v404
      %v528 = vunpack.c.l.b16 %v405
      %v529 = vunpack.c.h.b16 %v405
      %v530 = vunpack.c.l.b16 %v406
      %v531 = vunpack.c.h.b16 %v406
      %v532 = vunpack.c.l.b16 %v407
      %v533 = vunpack.c.h.b16 %v407
      %v534 = vunpack.c.l.b16 %v408
      %v535 = vunpack.c.h.b16 %v408
      %v536 = vunpack.c.l.b16 %v409
      %v537 = vunpack.c.h.b16 %v409
      %v538 = vpack.c.b16 %v476, %v474
      %v539 = vpack.c.b16 %v477, %v475
      %v540 = vpack.c.b16 %v480, %v478
      %v541 = vpack.c.b16 %v481, %v479
      %v542 = vpack.c.b16 %v484, %v482
      %v543 = vpack.c.b16 %v485, %v483
      %v544 = vpack.c.b16 %v488, %v486
      %v545 = vpack.c.b16 %v489, %v487
      %v546 = vpack.c.b16 %v492, %v490
      %v547 = vpack.c.b16 %v493, %v491
      %v548 = vpack.c.b16 %v496, %v494
      %v549 = vpack.c.b16 %v497, %v495
      %v550 = vpack.c.b16 %v500, %v498
      %v551 = vpack.c.b16 %v501, %v499
      %v552 = vpack.c.b16 %v504, %v502
      %v553 = vpack.c.b16 %v505, %v503
      %v554 = vpack.c.b16 %v508, %v506
      %v555 = vpack.c.b16 %v509, %v507
      %v556 = vpack.c.b16 %v512, %v510
      %v557 = vpack.c.b16 %v513, %v511
      %v558 = vpack.c.b16 %v516, %v514
      %v559 = vpack.c.b16 %v517, %v515
      %v560 = vpack.c.b16 %v520, %v518
      %v561 = vpack.c.b16 %v521, %v519
      %v562 = vpack.c.b16 %v524, %v522
      %v563 = vpack.c.b16 %v525, %v523
      %v564 = vpack.c.b16 %v528, %v526
      %v565 = vpack.c.b16 %v529, %v527
      %v566 = vpack.c.b16 %v532, %v530
      %v567 = vpack.c.b16 %v533, %v531
      %v568 = vpack.c.b16 %v536, %v534
      %v569 = vpack.c.b16 %v537, %v535
      %v634 = vunpack.c.l.b16 %v410
      %v635 = vunpack.c.l.b16 %v411
      %v636 = vunpack.c.l.b16 %v412
      %v637 = vunpack.c.l.b16 %v413
      %v638 = vunpack.c.l.b16 %v414
      %v639 = vunpack.c.l.b16 %v415
      %v640 = vunpack.c.l.b16 %v416
      %v641 = vunpack.c.l.b16 %v417
      %v642 = vunpack.c.l.b16 %v418
      %v643 = vunpack.c.l.b16 %v419
      %v644 = vunpack.c.l.b16 %v420
      %v645 = vunpack.c.l.b16 %v421
      %v646 = vunpack.c.l.b16 %v422
      %v647 = vunpack.c.l.b16 %v423
      %v648 = vunpack.c.l.b16 %v424
      %v649 = vunpack.c.l.b16 %v425
      %v650 = vunpack.c.l.b16 %v426
      %v651 = vunpack.c.l.b16 %v427
      %v652 = vunpack.c.l.b16 %v428
      %v653 = vunpack.c.l.b16 %v429
      %v654 = vunpack.c.l.b16 %v430
      %v655 = vunpack.c.l.b16 %v431
      %v656 = vunpack.c.l.b16 %v432
      %v657 = vunpack.c.l.b16 %v433
      %v658 = vunpack.c.l.b16 %v434
      %v659 = vunpack.c.l.b16 %v435
      %v660 = vunpack.c.l.b16 %v436
      %v661 = vunpack.c.l.b16 %v437
      %v662 = vunpack.c.l.b16 %v438
      %v663 = vunpack.c.l.b16 %v439
      %v664 = vunpack.c.l.b16 %v440
      %v665 = vunpack.c.l.b16 %v441
      %v666 = vpack.c.b16 %v635, %v634
      %v667 = vpack.c.b16 %v637, %v636
      %v668 = vpack.c.b16 %v639, %v638
      %v669 = vpack.c.b16 %v641, %v640
      %v670 = vpack.c.b16 %v643, %v642
      %v671 = vpack.c.b16 %v645, %v644
      %v672 = vpack.c.b16 %v647, %v646
      %v673 = vpack.c.b16 %v649, %v648
      %v674 = vpack.c.b16 %v651, %v650
      %v675 = vpack.c.b16 %v653, %v652
      %v676 = vpack.c.b16 %v655, %v654
      %v677 = vpack.c.b16 %v657, %v656
      %v678 = vpack.c.b16 %v659, %v658
      %v679 = vpack.c.b16 %v661, %v660
      %v680 = vpack.c.b16 %v663, %v662
      %v681 = vpack.c.b16 %v665, %v664
      %698 = vmatprep.subr.bf16.mxu0 0
      %699 = vmatpush1.bf16.msra.mxu0 %v666
      %700 = vmatprep.subr.bf16.mxu0 0
      %701 = vmatpush1.bf16.msra.mxu0 %v667
      %702 = vmatprep.subr.bf16.mxu0 0
      %703 = vmatpush1.bf16.msra.mxu0 %v668
      %704 = vmatprep.subr.bf16.mxu0 0
      %705 = vmatpush1.bf16.msra.mxu0 %v669
      %706 = vmatprep.subr.bf16.mxu0 0
      %707 = vmatpush1.bf16.msra.mxu0 %v670
      %708 = vmatprep.subr.bf16.mxu0 0
      %709 = vmatpush1.bf16.msra.mxu0 %v671
      %710 = vmatprep.subr.bf16.mxu0 0
      %711 = vmatpush1.bf16.msra.mxu0 %v672
      %712 = vmatprep.subr.bf16.mxu0 0
      %713 = vmatpush1.bf16.msra.mxu0 %v673
      %714 = vmatprep.subr.bf16.mxu0 0
      %715 = vmatpush1.bf16.msra.mxu0 %v674
      %716 = vmatprep.subr.bf16.mxu0 0
      %717 = vmatpush1.bf16.msra.mxu0 %v675
      %718 = vmatprep.subr.bf16.mxu0 0
      %719 = vmatpush1.bf16.msra.mxu0 %v676
      %720 = vmatprep.subr.bf16.mxu0 0
      %721 = vmatpush1.bf16.msra.mxu0 %v677
      %722 = vmatprep.subr.bf16.mxu0 0
      %723 = vmatpush1.bf16.msra.mxu0 %v678
      %724 = vmatprep.subr.bf16.mxu0 0
      %725 = vmatpush1.bf16.msra.mxu0 %v679
      %726 = vmatprep.subr.bf16.mxu0 0
      %727 = vmatpush1.bf16.msra.mxu0 %v680
      %728 = vmatprep.subr.bf16.mxu0 0
      %729 = vmatpush1.bf16.msra.mxu0 %v681
      %730 = vmatprep.mubr.bf16.mxu0 %v539
      %731 = vmatmul.mubr.bf16.gmra.mrb[0].mxu0 %v538
      %v732 = vpop.f32.mrb[0].mxu0
      %v733 = vadd.f32 0.0, %v732
      %v734 = vpop.f32.mrb[0].mxu0
      %v735 = vpop.f32.mrb[0].mxu0
      %v736 = vadd.f32 0.0, %v735
      %v737 = vpop.f32.mrb[0].mxu0
      %738 = vmatprep.mubr.bf16.mxu0 %v541
      %739 = vmatmul.mubr.bf16.gmra.mrb[0].mxu0 %v540
      %v740 = vpop.f32.mrb[0].mxu0
      %v741 = vadd.f32 0.0, %v740
      %v742 = vpop.f32.mrb[0].mxu0
      %v743 = vpop.f32.mrb[0].mxu0
      %v744 = vadd.f32 0.0, %v743
      %v745 = vpop.f32.mrb[0].mxu0
      %746 = vmatprep.mubr.bf16.mxu0 %v543
      %747 = vmatmul.mubr.bf16.gmra.mrb[0].mxu0 %v542
      %v748 = vpop.f32.mrb[0].mxu0
      %v749 = vadd.f32 0.0, %v748
      %v750 = vpop.f32.mrb[0].mxu0
      %v751 = vpop.f32.mrb[0].mxu0
      %v752 = vadd.f32 0.0, %v751
      %v753 = vpop.f32.mrb[0].mxu0
      %754 = vmatprep.mubr.bf16.mxu0 %v545
      %755 = vmatmul.mubr.bf16.gmra.mrb[0].mxu0 %v544
      %v756 = vpop.f32.mrb[0].mxu0
      %v757 = vadd.f32 0.0, %v756
      %v758 = vpop.f32.mrb[0].mxu0
      %v759 = vpop.f32.mrb[0].mxu0
      %v760 = vadd.f32 0.0, %v759
      %v761 = vpop.f32.mrb[0].mxu0
      %762 = vmatprep.mubr.bf16.mxu0 %v547
      %763 = vmatmul.mubr.bf16.gmra.mrb[0].mxu0 %v546
      %v764 = vpop.f32.mrb[0].mxu0
      %v765 = vadd.f32 0.0, %v764
      %v766 = vpop.f32.mrb[0].mxu0
      %v767 = vpop.f32.mrb[0].mxu0
      %v768 = vadd.f32 0.0, %v767
      %v769 = vpop.f32.mrb[0].mxu0
      %770 = vmatprep.mubr.bf16.mxu0 %v549
      %771 = vmatmul.mubr.bf16.gmra.mrb[0].mxu0 %v548
      %v772 = vpop.f32.mrb[0].mxu0
      %v773 = vadd.f32 0.0, %v772
      %v774 = vpop.f32.mrb[0].mxu0
      %v775 = vpop.f32.mrb[0].mxu0
      %v776 = vadd.f32 0.0, %v775
      %v777 = vpop.f32.mrb[0].mxu0
      %778 = vmatprep.mubr.bf16.mxu0 %v551
      %779 = vmatmul.mubr.bf16.gmra.mrb[0].mxu0 %v550
      %v780 = vpop.f32.mrb[0].mxu0
      %v781 = vadd.f32 0.0, %v780
      %v782 = vpop.f32.mrb[0].mxu0
      %v783 = vpop.f32.mrb[0].mxu0
      %v784 = vadd.f32 0.0, %v783
      %v785 = vpop.f32.mrb[0].mxu0
      %786 = vmatprep.mubr.bf16.mxu0 %v553
      %787 = vmatmul.mubr.bf16.gmra.mrb[0].mxu0 %v552
      %v788 = vpop.f32.mrb[0].mxu0
      %v789 = vadd.f32 0.0, %v788
      %v790 = vpop.f32.mrb[0].mxu0
      %v791 = vpop.f32.mrb[0].mxu0
      %v792 = vadd.f32 0.0, %v791
      %v793 = vpop.f32.mrb[0].mxu0
      %794 = vmatprep.mubr.bf16.mxu0 %v555
      %795 = vmatmul.mubr.bf16.gmra.mrb[0].mxu0 %v554
      %v796 = vpop.f32.mrb[0].mxu0
      %v797 = vadd.f32 0.0, %v796
      %v798 = vpop.f32.mrb[0].mxu0
      %v799 = vpop.f32.mrb[0].mxu0
      %v800 = vadd.f32 0.0, %v799
      %v801 = vpop.f32.mrb[0].mxu0
      %802 = vmatprep.mubr.bf16.mxu0 %v557
      %803 = vmatmul.mubr.bf16.gmra.mrb[0].mxu0 %v556
      %v804 = vpop.f32.mrb[0].mxu0
      %v805 = vadd.f32 0.0, %v804
      %v806 = vpop.f32.mrb[0].mxu0
      %v807 = vpop.f32.mrb[0].mxu0
      %v808 = vadd.f32 0.0, %v807
      %v809 = vpop.f32.mrb[0].mxu0
      %810 = vmatprep.mubr.bf16.mxu0 %v559
      %811 = vmatmul.mubr.bf16.gmra.mrb[0].mxu0 %v558
      %v812 = vpop.f32.mrb[0].mxu0
      %v813 = vadd.f32 0.0, %v812
      %v814 = vpop.f32.mrb[0].mxu0
      %v815 = vpop.f32.mrb[0].mxu0
      %v816 = vadd.f32 0.0, %v815
      %v817 = vpop.f32.mrb[0].mxu0
      %818 = vmatprep.mubr.bf16.mxu0 %v561
      %819 = vmatmul.mubr.bf16.gmra.mrb[0].mxu0 %v560
      %v820 = vpop.f32.mrb[0].mxu0
      %v821 = vadd.f32 0.0, %v820
      %v822 = vpop.f32.mrb[0].mxu0
      %v823 = vpop.f32.mrb[0].mxu0
      %v824 = vadd.f32 0.0, %v823
      %v825 = vpop.f32.mrb[0].mxu0
      %826 = vmatprep.mubr.bf16.mxu0 %v563
      %827 = vmatmul.mubr.bf16.gmra.mrb[0].mxu0 %v562
      %v828 = vpop.f32.mrb[0].mxu0
      %v829 = vadd.f32 0.0, %v828
      %v830 = vpop.f32.mrb[0].mxu0
      %v831 = vpop.f32.mrb[0].mxu0
      %v832 = vadd.f32 0.0, %v831
      %v833 = vpop.f32.mrb[0].mxu0
      %834 = vmatprep.mubr.bf16.mxu0 %v565
      %835 = vmatmul.mubr.bf16.gmra.mrb[0].mxu0 %v564
      %v836 = vpop.f32.mrb[0].mxu0
      %v837 = vadd.f32 0.0, %v836
      %v838 = vpop.f32.mrb[0].mxu0
      %v839 = vpop.f32.mrb[0].mxu0
      %v840 = vadd.f32 0.0, %v839
      %v841 = vpop.f32.mrb[0].mxu0
      %842 = vmatprep.mubr.bf16.mxu0 %v567
      %843 = vmatmul.mubr.bf16.gmra.mrb[0].mxu0 %v566
      %v844 = vpop.f32.mrb[0].mxu0
      %v845 = vadd.f32 0.0, %v844
      %v846 = vpop.f32.mrb[0].mxu0
      %v847 = vpop.f32.mrb[0].mxu0
      %v848 = vadd.f32 0.0, %v847
      %v849 = vpop.f32.mrb[0].mxu0
      %850 = vmatprep.mubr.bf16.mxu0 %v569
      %851 = vmatmul.mubr.bf16.gmra.mrb[0].mxu0 %v568
      %v852 = vpop.f32.mrb[0].mxu0
      %v853 = vadd.f32 0.0, %v852
      %v854 = vpop.f32.mrb[0].mxu0
      %v855 = vpop.f32.mrb[0].mxu0
      %v856 = vadd.f32 0.0, %v855
      %v857 = vpop.f32.mrb[0].mxu0
      %858 = vdwg.mxu0
      %v859 = vadd.f32 %v346, %v733
      %v860 = vadd.f32 %v347, %v736
      %v861 = vadd.f32 %v348, %v741
      %v862 = vadd.f32 %v349, %v744
      %v863 = vadd.f32 %v350, %v749
      %v864 = vadd.f32 %v351, %v752
      %v865 = vadd.f32 %v352, %v757
      %v866 = vadd.f32 %v353, %v760
      %v867 = vadd.f32 %v354, %v765
      %v868 = vadd.f32 %v355, %v768
      %v869 = vadd.f32 %v356, %v773
      %v870 = vadd.f32 %v357, %v776
      %v871 = vadd.f32 %v358, %v781
      %v872 = vadd.f32 %v359, %v784
      %v873 = vadd.f32 %v360, %v789
      %v874 = vadd.f32 %v361, %v792
      %v875 = vadd.f32 %v362, %v797
      %v876 = vadd.f32 %v363, %v800
      %v877 = vadd.f32 %v364, %v805
      %v878 = vadd.f32 %v365, %v808
      %v879 = vadd.f32 %v366, %v813
      %v880 = vadd.f32 %v367, %v816
      %v881 = vadd.f32 %v368, %v821
      %v882 = vadd.f32 %v369, %v824
      %v883 = vadd.f32 %v370, %v829
      %v884 = vadd.f32 %v371, %v832
      %v885 = vadd.f32 %v372, %v837
      %v886 = vadd.f32 %v373, %v840
      %v887 = vadd.f32 %v374, %v845
      %v888 = vadd.f32 %v375, %v848
      %v889 = vadd.f32 %v376, %v853
      %v890 = vadd.f32 %v377, %v856
      %vm891 = vcmask 523264
      %892 = vst.msk [vmem:[#allocation2] sm:$0xff] %vm891, %v859
      %893 = vst.msk [vmem:[#allocation2 + $0x8] sm:$0xff] %vm891, %v860
      %894 = vst.msk [vmem:[#allocation2 + $0x10] sm:$0xff] %vm891, %v861
      %895 = vst.msk [vmem:[#allocation2 + $0x18] sm:$0xff] %vm891, %v862
      %896 = vst.msk [vmem:[#allocation2 + $0x20] sm:$0xff] %vm891, %v863
      %897 = vst.msk [vmem:[#allocation2 + $0x28] sm:$0xff] %vm891, %v864
      %898 = vst.msk [vmem:[#allocation2 + $0x30] sm:$0xff] %vm891, %v865
      %899 = vst.msk [vmem:[#allocation2 + $0x38] sm:$0xff] %vm891, %v866
      %900 = vst.msk [vmem:[#allocation2 + $0x40] sm:$0xff] %vm891, %v867
      %901 = vst.msk [vmem:[#allocation2 + $0x48] sm:$0xff] %vm891, %v868
      %902 = vst.msk [vmem:[#allocation2 + $0x50] sm:$0xff] %vm891, %v869
      %903 = vst.msk [vmem:[#allocation2 + $0x58] sm:$0xff] %vm891, %v870
      %904 = vst.msk [vmem:[#allocation2 + $0x60] sm:$0xff] %vm891, %v871
      %905 = vst.msk [vmem:[#allocation2 + $0x68] sm:$0xff] %vm891, %v872
      %906 = vst.msk [vmem:[#allocation2 + $0x70] sm:$0xff] %vm891, %v873
      %907 = vst.msk [vmem:[#allocation2 + $0x78] sm:$0xff] %vm891, %v874
      %908 = vst.msk [vmem:[#allocation2 + $0x80] sm:$0xff] %vm891, %v875
      %909 = vst.msk [vmem:[#allocation2 + $0x88] sm:$0xff] %vm891, %v876
      %910 = vst.msk [vmem:[#allocation2 + $0x90] sm:$0xff] %vm891, %v877
      %911 = vst.msk [vmem:[#allocation2 + $0x98] sm:$0xff] %vm891, %v878
      %912 = vst.msk [vmem:[#allocation2 + $0xa0] sm:$0xff] %vm891, %v879
      %913 = vst.msk [vmem:[#allocation2 + $0xa8] sm:$0xff] %vm891, %v880
      %914 = vst.msk [vmem:[#allocation2 + $0xb0] sm:$0xff] %vm891, %v881
      %915 = vst.msk [vmem:[#allocation2 + $0xb8] sm:$0xff] %vm891, %v882
      %916 = vst.msk [vmem:[#allocation2 + $0xc0] sm:$0xff] %vm891, %v883
      %917 = vst.msk [vmem:[#allocation2 + $0xc8] sm:$0xff] %vm891, %v884
      %918 = vst.msk [vmem:[#allocation2 + $0xd0] sm:$0xff] %vm891, %v885
      %919 = vst.msk [vmem:[#allocation2 + $0xd8] sm:$0xff] %vm891, %v886
      %920 = vst.msk [vmem:[#allocation2 + $0xe0] sm:$0xff] %vm891, %v887
      %921 = vst.msk [vmem:[#allocation2 + $0xe8] sm:$0xff] %vm891, %v888
      %922 = vst.msk [vmem:[#allocation2 + $0xf0] sm:$0xff] %vm891, %v889
      %923 = vst.msk [vmem:[#allocation2 + $0xf8] sm:$0xff] %vm891, %v890
      // Predicated region
      $region41: #{matmul_scale_bias.1} parent=35 // pred_check
        %p924 = pneg %p309
      $region42: #{matmul_scale_bias.1} parent=35 // pred_check_branch
        %926 = sbr.rel (%p924) target = $region44
      $region43: #{matmul_scale_bias.1} parent=35 // pred_region
        %v927 = vld [vmem:[#allocation2] sm:$0xff]
        %v928 = vld [vmem:[#allocation2 + $0x8] sm:$0xff]
        %v929 = vld [vmem:[#allocation2 + $0x10] sm:$0xff]
        %v930 = vld [vmem:[#allocation2 + $0x18] sm:$0xff]
        %v931 = vld [vmem:[#allocation2 + $0x20] sm:$0xff]
        %v932 = vld [vmem:[#allocation2 + $0x28] sm:$0xff]
        %v933 = vld [vmem:[#allocation2 + $0x30] sm:$0xff]
        %v934 = vld [vmem:[#allocation2 + $0x38] sm:$0xff]
        %v935 = vld [vmem:[#allocation2 + $0x40] sm:$0xff]
        %v936 = vld [vmem:[#allocation2 + $0x48] sm:$0xff]
        %v937 = vld [vmem:[#allocation2 + $0x50] sm:$0xff]
        %v938 = vld [vmem:[#allocation2 + $0x58] sm:$0xff]
        %v939 = vld [vmem:[#allocation2 + $0x60] sm:$0xff]
        %v940 = vld [vmem:[#allocation2 + $0x68] sm:$0xff]
        %v941 = vld [vmem:[#allocation2 + $0x70] sm:$0xff]
        %v942 = vld [vmem:[#allocation2 + $0x78] sm:$0xff]
        %v943 = vld [vmem:[#allocation2 + $0x80] sm:$0xff]
        %v944 = vld [vmem:[#allocation2 + $0x88] sm:$0xff]
        %v945 = vld [vmem:[#allocation2 + $0x90] sm:$0xff]
        %v946 = vld [vmem:[#allocation2 + $0x98] sm:$0xff]
        %v947 = vld [vmem:[#allocation2 + $0xa0] sm:$0xff]
        %v948 = vld [vmem:[#allocation2 + $0xa8] sm:$0xff]
        %v949 = vld [vmem:[#allocation2 + $0xb0] sm:$0xff]
        %v950 = vld [vmem:[#allocation2 + $0xb8] sm:$0xff]
        %v951 = vld [vmem:[#allocation2 + $0xc0] sm:$0xff]
        %v952 = vld [vmem:[#allocation2 + $0xc8] sm:$0xff]
        %v953 = vld [vmem:[#allocation2 + $0xd0] sm:$0xff]
        %v954 = vld [vmem:[#allocation2 + $0xd8] sm:$0xff]
        %v955 = vld [vmem:[#allocation2 + $0xe0] sm:$0xff]
        %v956 = vld [vmem:[#allocation2 + $0xe8] sm:$0xff]
        %v957 = vld [vmem:[#allocation2 + $0xf0] sm:$0xff]
        %v958 = vld [vmem:[#allocation2 + $0xf8] sm:$0xff]
        %v959 = vld [vmem:[%s295] sm:$0x1]
        %v961 = vlaneseq
        %v962 = vshrl.u32 %v961, 7
        %v963 = vsub.s32 0, %v962
        %v964 = vrot.slane %v959, %v963
        %v966 = vmul.f32 %v927, %v964
        %v967 = vmul.f32 %v928, %v964
        %v968 = vmul.f32 %v929, %v964
        %v969 = vmul.f32 %v930, %v964
        %v970 = vmul.f32 %v931, %v964
        %v971 = vmul.f32 %v932, %v964
        %v972 = vmul.f32 %v933, %v964
        %v973 = vmul.f32 %v934, %v964
        %v974 = vmul.f32 %v935, %v964
        %v975 = vmul.f32 %v936, %v964
        %v976 = vmul.f32 %v937, %v964
        %v977 = vmul.f32 %v938, %v964
        %v978 = vmul.f32 %v939, %v964
        %v979 = vmul.f32 %v940, %v964
        %v980 = vmul.f32 %v941, %v964
        %v981 = vmul.f32 %v942, %v964
        %v982 = vmul.f32 %v943, %v964
        %v983 = vmul.f32 %v944, %v964
        %v984 = vmul.f32 %v945, %v964
        %v985 = vmul.f32 %v946, %v964
        %v986 = vmul.f32 %v947, %v964
        %v987 = vmul.f32 %v948, %v964
        %v988 = vmul.f32 %v949, %v964
        %v989 = vmul.f32 %v950, %v964
        %v990 = vmul.f32 %v951, %v964
        %v991 = vmul.f32 %v952, %v964
        %v992 = vmul.f32 %v953, %v964
        %v993 = vmul.f32 %v954, %v964
        %v994 = vmul.f32 %v955, %v964
        %v995 = vmul.f32 %v956, %v964
        %v996 = vmul.f32 %v957, %v964
        %v997 = vmul.f32 %v958, %v964
        %v998 = vld [vmem:[%s298] sm:$0x1]
        %v1000 = vlaneseq
        %v1001 = vshrl.u32 %v1000, 7
        %v1002 = vsub.s32 0, %v1001
        %v1003 = vrot.slane %v998, %v1002
        %v1005 = vadd.f32 %v966, %v1003
        %v1006 = vadd.f32 %v967, %v1003
        %v1007 = vadd.f32 %v968, %v1003
        %v1008 = vadd.f32 %v969, %v1003
        %v1009 = vadd.f32 %v970, %v1003
        %v1010 = vadd.f32 %v971, %v1003
        %v1011 = vadd.f32 %v972, %v1003
        %v1012 = vadd.f32 %v973, %v1003
        %v1013 = vadd.f32 %v974, %v1003
        %v1014 = vadd.f32 %v975, %v1003
        %v1015 = vadd.f32 %v976, %v1003
        %v1016 = vadd.f32 %v977, %v1003
        %v1017 = vadd.f32 %v978, %v1003
        %v1018 = vadd.f32 %v979, %v1003
        %v1019 = vadd.f32 %v980, %v1003
        %v1020 = vadd.f32 %v981, %v1003
        %v1021 = vadd.f32 %v982, %v1003
        %v1022 = vadd.f32 %v983, %v1003
        %v1023 = vadd.f32 %v984, %v1003
        %v1024 = vadd.f32 %v985, %v1003
        %v1025 = vadd.f32 %v986, %v1003
        %v1026 = vadd.f32 %v987, %v1003
        %v1027 = vadd.f32 %v988, %v1003
        %v1028 = vadd.f32 %v989, %v1003
        %v1029 = vadd.f32 %v990, %v1003
        %v1030 = vadd.f32 %v991, %v1003
        %v1031 = vadd.f32 %v992, %v1003
        %v1032 = vadd.f32 %v993, %v1003
        %v1033 = vadd.f32 %v994, %v1003
        %v1034 = vadd.f32 %v995, %v1003
        %v1035 = vadd.f32 %v996, %v1003
        %v1036 = vadd.f32 %v997, %v1003
        %v1037 = vmax.f32 %v1005, 0.0
        %v1038 = vmax.f32 %v1006, 0.0
        %v1039 = vmax.f32 %v1007, 0.0
        %v1040 = vmax.f32 %v1008, 0.0
        %v1041 = vmax.f32 %v1009, 0.0
        %v1042 = vmax.f32 %v1010, 0.0
        %v1043 = vmax.f32 %v1011, 0.0
        %v1044 = vmax.f32 %v1012, 0.0
        %v1045 = vmax.f32 %v1013, 0.0
        %v1046 = vmax.f32 %v1014, 0.0
        %v1047 = vmax.f32 %v1015, 0.0
        %v1048 = vmax.f32 %v1016, 0.0
        %v1049 = vmax.f32 %v1017, 0.0
        %v1050 = vmax.f32 %v1018, 0.0
        %v1051 = vmax.f32 %v1019, 0.0
        %v1052 = vmax.f32 %v1020, 0.0
        %v1053 = vmax.f32 %v1021, 0.0
        %v1054 = vmax.f32 %v1022, 0.0
        %v1055 = vmax.f32 %v1023, 0.0
        %v1056 = vmax.f32 %v1024, 0.0
        %v1057 = vmax.f32 %v1025, 0.0
        %v1058 = vmax.f32 %v1026, 0.0
        %v1059 = vmax.f32 %v1027, 0.0
        %v1060 = vmax.f32 %v1028, 0.0
        %v1061 = vmax.f32 %v1029, 0.0
        %v1062 = vmax.f32 %v1030, 0.0
        %v1063 = vmax.f32 %v1031, 0.0
        %v1064 = vmax.f32 %v1032, 0.0
        %v1065 = vmax.f32 %v1033, 0.0
        %v1066 = vmax.f32 %v1034, 0.0
        %v1067 = vmax.f32 %v1035, 0.0
        %v1068 = vmax.f32 %v1036, 0.0
        %v1069 = vpack.c.bf16 %v1038, %v1037
        %v1070 = vpack.c.bf16 %v1040, %v1039
        %v1071 = vpack.c.bf16 %v1042, %v1041
        %v1072 = vpack.c.bf16 %v1044, %v1043
        %v1073 = vpack.c.bf16 %v1046, %v1045
        %v1074 = vpack.c.bf16 %v1048, %v1047
        %v1075 = vpack.c.bf16 %v1050, %v1049
        %v1076 = vpack.c.bf16 %v1052, %v1051
        %v1077 = vpack.c.bf16 %v1054, %v1053
        %v1078 = vpack.c.bf16 %v1056, %v1055
        %v1079 = vpack.c.bf16 %v1058, %v1057
        %v1080 = vpack.c.bf16 %v1060, %v1059
        %v1081 = vpack.c.bf16 %v1062, %v1061
        %v1082 = vpack.c.bf16 %v1064, %v1063
        %v1083 = vpack.c.bf16 %v1066, %v1065
        %v1084 = vpack.c.bf16 %v1068, %v1067
        %v1101 = vunpack.c.l.b16 %v1069
        %v1102 = vunpack.c.h.b16 %v1069
        %v1103 = vunpack.c.l.b16 %v1070
        %v1104 = vunpack.c.h.b16 %v1070
        %v1105 = vunpack.c.l.b16 %v1071
        %v1106 = vunpack.c.h.b16 %v1071
        %v1107 = vunpack.c.l.b16 %v1072
        %v1108 = vunpack.c.h.b16 %v1072
        %v1109 = vunpack.c.l.b16 %v1073
        %v1110 = vunpack.c.h.b16 %v1073
        %v1111 = vunpack.c.l.b16 %v1074
        %v1112 = vunpack.c.h.b16 %v1074
        %v1113 = vunpack.c.l.b16 %v1075
        %v1114 = vunpack.c.h.b16 %v1075
        %v1115 = vunpack.c.l.b16 %v1076
        %v1116 = vunpack.c.h.b16 %v1076
        %v1117 = vunpack.c.l.b16 %v1077
        %v1118 = vunpack.c.h.b16 %v1077
        %v1119 = vunpack.c.l.b16 %v1078
        %v1120 = vunpack.c.h.b16 %v1078
        %v1121 = vunpack.c.l.b16 %v1079
        %v1122 = vunpack.c.h.b16 %v1079
        %v1123 = vunpack.c.l.b16 %v1080
        %v1124 = vunpack.c.h.b16 %v1080
        %v1125 = vunpack.c.l.b16 %v1081
        %v1126 = vunpack.c.h.b16 %v1081
        %v1127 = vunpack.c.l.b16 %v1082
        %v1128 = vunpack.c.h.b16 %v1082
        %v1129 = vunpack.c.l.b16 %v1083
        %v1130 = vunpack.c.h.b16 %v1083
        %v1131 = vunpack.c.l.b16 %v1084
        %v1132 = vunpack.c.h.b16 %v1084
        %v1133 = vpack.c.b16 %v1101, %v1101
        %v1134 = vpack.c.b16 %v1102, %v1102
        %v1135 = vpack.c.b16 %v1103, %v1103
        %v1136 = vpack.c.b16 %v1104, %v1104
        %v1137 = vpack.c.b16 %v1105, %v1105
        %v1138 = vpack.c.b16 %v1106, %v1106
        %v1139 = vpack.c.b16 %v1107, %v1107
        %v1140 = vpack.c.b16 %v1108, %v1108
        %v1141 = vpack.c.b16 %v1109, %v1109
        %v1142 = vpack.c.b16 %v1110, %v1110
        %v1143 = vpack.c.b16 %v1111, %v1111
        %v1144 = vpack.c.b16 %v1112, %v1112
        %v1145 = vpack.c.b16 %v1113, %v1113
        %v1146 = vpack.c.b16 %v1114, %v1114
        %v1147 = vpack.c.b16 %v1115, %v1115
        %v1148 = vpack.c.b16 %v1116, %v1116
        %v1149 = vpack.c.b16 %v1117, %v1117
        %v1150 = vpack.c.b16 %v1118, %v1118
        %v1151 = vpack.c.b16 %v1119, %v1119
        %v1152 = vpack.c.b16 %v1120, %v1120
        %v1153 = vpack.c.b16 %v1121, %v1121
        %v1154 = vpack.c.b16 %v1122, %v1122
        %v1155 = vpack.c.b16 %v1123, %v1123
        %v1156 = vpack.c.b16 %v1124, %v1124
        %v1157 = vpack.c.b16 %v1125, %v1125
        %v1158 = vpack.c.b16 %v1126, %v1126
        %v1159 = vpack.c.b16 %v1127, %v1127
        %v1160 = vpack.c.b16 %v1128, %v1128
        %v1161 = vpack.c.b16 %v1129, %v1129
        %v1162 = vpack.c.b16 %v1130, %v1130
        %v1163 = vpack.c.b16 %v1131, %v1131
        %v1164 = vpack.c.b16 %v1132, %v1132
        %vm1197 = vcmask 519168
        %1198 = vst.msk [vmem:[%s306] sm:$0xf] %vm1197, %v1133
        %1199 = vst.msk [vmem:[%s306 + $0x4] sm:$0xf] %vm1197, %v1134
        %1200 = vst.msk [vmem:[%s306 + $0x8] sm:$0xf] %vm1197, %v1135
        %1201 = vst.msk [vmem:[%s306 + $0xc] sm:$0xf] %vm1197, %v1136
        %1202 = vst.msk [vmem:[%s306 + $0x10] sm:$0xf] %vm1197, %v1137
        %1203 = vst.msk [vmem:[%s306 + $0x14] sm:$0xf] %vm1197, %v1138
        %1204 = vst.msk [vmem:[%s306 + $0x18] sm:$0xf] %vm1197, %v1139
        %1205 = vst.msk [vmem:[%s306 + $0x1c] sm:$0xf] %vm1197, %v1140
        %1206 = vst.msk [vmem:[%s306 + $0x20] sm:$0xf] %vm1197, %v1141
        %1207 = vst.msk [vmem:[%s306 + $0x24] sm:$0xf] %vm1197, %v1142
        %1208 = vst.msk [vmem:[%s306 + $0x28] sm:$0xf] %vm1197, %v1143
        %1209 = vst.msk [vmem:[%s306 + $0x2c] sm:$0xf] %vm1197, %v1144
        %1210 = vst.msk [vmem:[%s306 + $0x30] sm:$0xf] %vm1197, %v1145
        %1211 = vst.msk [vmem:[%s306 + $0x34] sm:$0xf] %vm1197, %v1146
        %1212 = vst.msk [vmem:[%s306 + $0x38] sm:$0xf] %vm1197, %v1147
        %1213 = vst.msk [vmem:[%s306 + $0x3c] sm:$0xf] %vm1197, %v1148
        %1214 = vst.msk [vmem:[%s306 + $0x40] sm:$0xf] %vm1197, %v1149
        %1215 = vst.msk [vmem:[%s306 + $0x44] sm:$0xf] %vm1197, %v1150
        %1216 = vst.msk [vmem:[%s306 + $0x48] sm:$0xf] %vm1197, %v1151
        %1217 = vst.msk [vmem:[%s306 + $0x4c] sm:$0xf] %vm1197, %v1152
        %1218 = vst.msk [vmem:[%s306 + $0x50] sm:$0xf] %vm1197, %v1153
        %1219 = vst.msk [vmem:[%s306 + $0x54] sm:$0xf] %vm1197, %v1154
        %1220 = vst.msk [vmem:[%s306 + $0x58] sm:$0xf] %vm1197, %v1155
        %1221 = vst.msk [vmem:[%s306 + $0x5c] sm:$0xf] %vm1197, %v1156
        %1222 = vst.msk [vmem:[%s306 + $0x60] sm:$0xf] %vm1197, %v1157
        %1223 = vst.msk [vmem:[%s306 + $0x64] sm:$0xf] %vm1197, %v1158
        %1224 = vst.msk [vmem:[%s306 + $0x68] sm:$0xf] %vm1197, %v1159
        %1225 = vst.msk [vmem:[%s306 + $0x6c] sm:$0xf] %vm1197, %v1160
        %1226 = vst.msk [vmem:[%s306 + $0x70] sm:$0xf] %vm1197, %v1161
        %1227 = vst.msk [vmem:[%s306 + $0x74] sm:$0xf] %vm1197, %v1162
        %1228 = vst.msk [vmem:[%s306 + $0x78] sm:$0xf] %vm1197, %v1163
        %1229 = vst.msk [vmem:[%s306 + $0x7c] sm:$0xf] %vm1197, %v1164
      $region44: #{matmul_scale_bias.1} parent=35 // pred_fallthru
        _
      %s1230 = smul.u32 32, %s20
      %p1231 = scmp.lt.s32.totalorder %s1230, 255
      %s1232 = scalar_select %p1231, %s1230, 255
      %p1233 = scmp.lt.s32.totalorder %s21, 0
      %s1234 = scalar_select %p1233, %s21, 0
      %s1235 = sadd.s32 %s1234, %s1232
      %s1236 = smul.addr %s1235, 4
      %s1237 = scalar_lea.vmem %s4, %s1236
      // Predicated region
      $region45: #{matmul_scale_bias.1} parent=35 // pred_check
        %p1238 = pneg %p162
      $region46: #{matmul_scale_bias.1} parent=35 // pred_check_branch
        %1240 = sbr.rel (%p1238) target = $region48
      $region47: #{matmul_scale_bias.1} parent=35 // pred_region
        %s1241 = smul.u32 32, %s20
      $region48: #{matmul_scale_bias.1} parent=35 // pred_fallthru
        _
    $region36: #{matmul_scale_bias.1} parent=5 // pred_fallthru
      _
    %p1242 = scmp.le.s32.totalorder 2, %s10
    // Predicated region
    $region49: #{matmul_scale_bias.1} parent=5 // pred_check
      %p1243 = pneg %p1242
    $region50: #{matmul_scale_bias.1} parent=5 // pred_check_branch
      %1245 = sbr.rel (%p1243) target = $region52
    $region51: #{matmul_scale_bias.1} parent=5 // pred_region
      %s1246 = ssub.s32 %s10, 2
      // Predicated region
      $region53: #{matmul_scale_bias.1} parent=51 // pred_check
        %p1247 = pneg %p168
      $region54: #{matmul_scale_bias.1} parent=51 // pred_check_branch
        %1249 = sbr.rel (%p1247) target = $region56
      $region55: #{matmul_scale_bias.1} parent=51 // pred_region
        %s1250 = smul.u32 32, %s23
        %p1251 = scmp.lt.s32.totalorder %s1250, 255
        %s1252 = scalar_select %p1251, %s1250, 255
        %p1253 = scmp.lt.s32.totalorder %s24, 0
        %s1254 = scalar_select %p1253, %s24, 0
        %s1255 = sadd.s32 %s1254, %s1252
        %s1256 = smul.addr %s1255, 4
        %s1257 = scalar_lea.vmem %s4, %s1256
      $region56: #{matmul_scale_bias.1} parent=51 // pred_fallthru
        _
    $region52: #{matmul_scale_bias.1} parent=5 // pred_fallthru
      _
  $region6: #{matmul_scale_bias.1} parent=0 // loop_footer
    %s14 = sadd.s32 1, %s10
  $region7: #{matmul_scale_bias.1} parent=0 // loop_footer_branch
    %9 = sbr.rel target = $region3
  $region8: #{matmul_scale_bias.1} parent=0 // loop_exit
    _

</llo_original>
